<compile_context>
chip_gen: v5e
topology: v5e:2x2
jax: 0.10.0
libtpu: 0.0.40
codegen_flags: <defaults>
</compile_context>

<pallas_src>
import math

import numpy as np
import jax
import jax.numpy as jnp
from jax.experimental import pallas as pl
from jax.experimental.pallas import tpu as pltpu


# ----------------------------------------------------------------------------
# Host-side precompute: exact NumPy replica of bicubic.cubic / bicubic.contribute
# ----------------------------------------------------------------------------
def _cubic_np(x):
    absx = np.abs(x)
    absx2 = absx * absx
    absx3 = absx2 * absx
    c1 = (absx <= 1).astype(np.float32)
    c2 = ((absx > 1) & (absx <= 2)).astype(np.float32)
    return ((1.5 * absx3 - 2.5 * absx2 + 1) * c1
            + (-0.5 * absx3 + 2.5 * absx2 - 4 * absx + 2) * c2)


def _contribute_np(in_size, out_size, scale):
    kernel_width = 4.0
    if scale < 1:
        kernel_width = 4.0 / scale
    x0 = np.arange(1, out_size[0] + 1, dtype=np.float32)
    x1 = np.arange(1, out_size[1] + 1, dtype=np.float32)
    u0 = x0 / scale + 0.5 * (1 - 1 / scale)
    u1 = x1 / scale + 0.5 * (1 - 1 / scale)
    left0 = np.floor(u0 - kernel_width / 2)
    left1 = np.floor(u1 - kernel_width / 2)
    P = int(np.ceil(kernel_width) + 2)
    taps = np.arange(P, dtype=np.float32)
    indice0 = left0[:, None] + taps[None, :]          # (out_h, P)
    indice1 = left1[:, None] + taps[None, :]          # (out_w, P)
    mid0 = u0[:, None] - indice0
    mid1 = u1[:, None] - indice1
    if scale < 1:
        weight0 = scale * _cubic_np(mid0 * scale)
        weight1 = scale * _cubic_np(mid1 * scale)
    else:
        weight0 = _cubic_np(mid0)
        weight1 = _cubic_np(mid1)
    weight0 = weight0 / np.sum(weight0, axis=1, keepdims=True)
    weight1 = weight1 / np.sum(weight1, axis=1, keepdims=True)
    indice0 = np.clip(indice0, 1, in_size[0])
    indice1 = np.clip(indice1, 1, in_size[1])
    # drop taps whose weight is zero for the first output position (as in torch)
    kill0 = weight0[0] == 0
    kill1 = weight1[0] == 0
    weight0 = weight0[:, ~kill0]
    weight1 = weight1[:, ~kill1]
    indice0 = indice0[:, ~kill0].astype(np.int64)
    indice1 = indice1[:, ~kill1].astype(np.int64)
    return weight0, weight1, indice0, indice1


def _build_resample_matrices(h, w, scale):
    out_h, out_w = int(h * scale), int(w * scale)
    weight0, weight1, indice0, indice1 = _contribute_np([h, w], [out_h, out_w], scale)
    # scatter-add taps into dense matrices (clamped boundary taps accumulate,
    # exactly matching the gather + weighted-sum semantics)
    W0 = np.zeros((out_h, h), dtype=np.float32)
    np.add.at(W0, (np.arange(out_h)[:, None], indice0 - 1), weight0.astype(np.float32))
    W1 = np.zeros((out_w, w), dtype=np.float32)
    np.add.at(W1, (np.arange(out_w)[:, None], indice1 - 1), weight1.astype(np.float32))
    return W0, W1


# ----------------------------------------------------------------------------
# Pallas kernel
# ----------------------------------------------------------------------------
def _make_kernel(g, h, out_w):
    def kernel(x_ref, w1t_ref, w0_ref, o_ref, u_ref, up_ref):
        # 1) column resample for all g images at once: (g*h, w) @ (w, out_w).
        #    The RHS is the plain per-image matrix -- no block-diagonal / kron.
        u_ref[...] = jnp.dot(
            x_ref[...], w1t_ref[...],
            preferred_element_type=jnp.float32).astype(u_ref.dtype)   # (g*h, out_w)
        # 2) lane-pack the (already scale*x smaller) intermediate into a VMEM
        #    scratch: g stacked (h, out_w) tiles -> (h, g*out_w).  These are
        #    VMEM-bandwidth copies; the HBM input never gets a transpose pass.
        for j in range(g):                                            # static unroll
            up_ref[:, j * out_w:(j + 1) * out_w] = u_ref[j * h:(j + 1) * h, :]
        # 3) row resample: (out_h, h) @ (h, g*out_w) -- lane-dense result and
        #    a lane-dense output store.
        y = jnp.dot(w0_ref[...], up_ref[...],
                    preferred_element_type=jnp.float32)               # (out_h, g*out_w)
        o_ref[0] = y.astype(o_ref.dtype)
    return kernel


# ----------------------------------------------------------------------------
# Group-size / VMEM-budget selection (per TPU generation)
# ----------------------------------------------------------------------------
def _lcm(a, b):
    return a * b // math.gcd(a, b)


def _round_up(a, b):
    return -(-a // b) * b


def _vmem_info():
    """(per-core VMEM capacity bytes, has_two_tensorcores).

    v5e/v6e: 128 MiB VMEM, 1 TC.  v7x-class: 64 MiB VMEM, 2 TCs.  Falls back to
    the conservative (64 MiB, 2 TC) assumption if the query is unavailable.
    """
    vmem = None
    try:
        info = pltpu.get_tpu_info()
        vmem = int(getattr(info, "vmem_capacity_bytes", 0)) or None
    except Exception:
        vmem = None
    if vmem is None:
        vmem = 64 * 1024 * 1024
    multi_core = vmem <= 64 * 1024 * 1024
    return vmem, multi_core


def _choose_group(n, h, w, out_h, out_w, itemsize, block_budget, multi_core):
    """How many images one grid step processes.

    Constraints / preferences:
      * g*out_w a multiple of 128 -> lane-dense final matmul + output stores
        (skipped if it would more than double the padded work),
      * g*h a multiple of 8       -> sublane-aligned input block,
      * 2x double-buffered in/out blocks + scratch within the per-generation
        VMEM budget,
      * on 2-TensorCore parts keep >= 2 grid steps so both cores get work,
      * g <= 256 to bound the unrolled in-kernel pack loop.
    """
    sub_align = 8 // math.gcd(h, 8)
    lane_align = 128 // math.gcd(out_w, 128)
    align = _lcm(sub_align, lane_align)
    if align > 256 or _round_up(n, align) > 2 * n:
        align = sub_align  # lane-dense rounding would pad too much work

    def vmem_per_group(g):
        in_blk = g * h * w * itemsize                 # x block (double-buffered)
        out_blk = out_h * g * out_w * itemsize        # y block (double-buffered)
        u_scr = g * h * out_w * itemsize              # column-resampled intermediate
        up_scr = h * g * out_w * itemsize             # lane-packed intermediate
        return 2 * in_blk + 2 * out_blk + u_scr + up_scr

    max_g = min(256, _round_up(n, align))
    g = align
    while g + align <= max_g and vmem_per_group(g + align) <= block_budget:
        g += align
    # TODO(synk): if even vmem_per_group(align) exceeds the budget (huge images),
    # switch to the banded K-reduction tiling instead of a full-image block.
    if multi_core and n >= 2 * align:
        g = min(g, max(align, (n // (2 * align)) * align))
    return g


# ----------------------------------------------------------------------------
# Wrapper
# ----------------------------------------------------------------------------
def bicubic_forward(x, scale=1.0 / 4.0, use_bf16_for_f32=False):
    b, c, h, w = x.shape
    out_h, out_w = int(h * scale), int(w * scale)
    n = b * c

    W0_np, W1_np = _build_resample_matrices(h, w, scale)

    # bf16 compute only for bf16 inputs (or the opt-in f32 fast path; ~1e-3 rel
    # accuracy, MXU bf16 peak).  f32 accumulation either way.
    if x.dtype == jnp.bfloat16 or (use_bf16_for_f32 and x.dtype == jnp.float32):
        compute_dtype = jnp.bfloat16
    else:
        compute_dtype = jnp.float32
    itemsize = jnp.dtype(compute_dtype).itemsize

    vmem_cap, multi_core = _vmem_info()
    # ~96 MiB scoped on 128-MiB parts (v5e/v6e), ~48 MiB on 64-MiB parts (v7x).
    vmem_limit = min((vmem_cap * 3) // 4, 100 * 1024 * 1024)
    block_budget = (vmem_limit * 4) // 5   # headroom for weights / internal scratch

    g = _choose_group(n, h, w, out_h, out_w, itemsize, block_budget, multi_core)
    num_groups = pl.cdiv(n, g)
    n_pad = num_groups * g

    # Natural layout in -- no HBM transpose pass.  (b,c,h,w) -> (n*h, w) is a
    # free row-major collapse; zero-pad along images only if n % g != 0.
    xf = x.reshape(n * h, w)
    if xf.dtype != compute_dtype:
        xf = xf.astype(compute_dtype)
    if n_pad != n:
        xf = jnp.pad(xf, ((0, (n_pad - n) * h), (0, 0)))

    w1t = jnp.asarray(W1_np.T, dtype=compute_dtype)    # (w, out_w): plain, no kron
    w0 = jnp.asarray(W0_np, dtype=compute_dtype)       # (out_h, h)

    out = pl.pallas_call(
        _make_kernel(g, h, out_w),
        out_shape=jax.ShapeDtypeStruct((num_groups, out_h, g * out_w), x.dtype),
        grid=(num_groups,),
        in_specs=[
            pl.BlockSpec((g * h, w), lambda i: (i, 0)),
            pl.BlockSpec((w, out_w), lambda i: (0, 0)),   # grid-invariant, stays resident
            pl.BlockSpec((out_h, h), lambda i: (0, 0)),   # grid-invariant, stays resident
        ],
        out_specs=pl.BlockSpec((1, out_h, g * out_w), lambda i: (i, 0, 0)),
        scratch_shapes=[
            pltpu.VMEM((g * h, out_w), compute_dtype),    # column-resampled intermediate
            pltpu.VMEM((h, g * out_w), compute_dtype),    # lane-packed intermediate
        ],
        compiler_params=pltpu.CompilerParams(
            dimension_semantics=("parallel",),
            vmem_limit_bytes=int(vmem_limit),
        ),
    )(xf, w1t, w0)

    # Unpack the lane-packed output.  The output is scale^2 the size of the
    # input, so this XLA-side transpose is cheap compared with the input-side
    # pack round trip the kernel no longer needs.
    y = (out.reshape(num_groups, out_h, g, out_w)
            .transpose(0, 2, 1, 3)
            .reshape(n_pad, out_h, out_w))[:n]
    return y.reshape(b, c, out_h, out_w)


# ----------------------------------------------------------------------------
# Pure-JAX reference (same math, no Pallas) for a sanity check
# ----------------------------------------------------------------------------
def _reference(x, scale=1.0 / 4.0):
    b, c, h, w = x.shape
    W0_np, W1_np = _build_resample_matrices(h, w, scale)
    W0 = jnp.asarray(W0_np)
    W1 = jnp.asarray(W1_np)
    return jnp.einsum("ph,bchw,qw->bcpq", W0, x, W1)


if __name__ == "__main__":
    key = jax.random.PRNGKey(0)
    x = jax.random.normal(key, (2, 4, 16, 16), dtype=jnp.float32)

    y = jax.block_until_ready(bicubic_forward(x, scale=1.0 / 4.0))
    y_ref = jax.block_until_ready(_reference(x, scale=1.0 / 4.0))

    assert y.shape == (2, 4, 4, 4), y.shape
    assert np.allclose(np.asarray(y), np.asarray(y_ref), rtol=1e-5, atol=1e-5)

    print("KERNEL_OK")
</pallas_src>

<mosaic_0001>
module attributes {stable_mosaic.version = 11 : i64} {
  func.func @kernel(%arg0: i32, %arg1: memref<64x16xf32, #tpu.memory_space<vmem>>, %arg2: memref<16x4xf32, #tpu.memory_space<vmem>>, %arg3: memref<4x16xf32, #tpu.memory_space<vmem>>, %arg4: memref<1x4x16xf32, #tpu.memory_space<vmem>>, %arg5: memref<64x4xf32, #tpu.memory_space<vmem>>, %arg6: memref<16x16xf32, #tpu.memory_space<vmem>>) attributes {dimension_semantics = [#tpu.dimension_semantics<parallel>], iteration_bounds = array<i64: 2>, scalar_prefetch = 0 : i64, scratch_operands = 2 : i64, tpu.core_type = #tpu.core_type<tc>, window_params = [{transform_indices = @transform_0, window_bounds = array<i64: 64, 16>}, {pipeline_mode = #tpu.pipeline_mode<synchronous>, transform_indices = @transform_1, window_bounds = array<i64: 16, 4>}, {pipeline_mode = #tpu.pipeline_mode<synchronous>, transform_indices = @transform_2, window_bounds = array<i64: 4, 16>}, {transform_indices = @transform_3, window_bounds = array<i64: 1, 4, 16>}]} {
    %c0 = arith.constant 0 : index
    %c0_0 = arith.constant 0 : index
    %0 = vector.load %arg1[%c0, %c0_0] : memref<64x16xf32, #tpu.memory_space<vmem>>, vector<64x16xf32>
    %c0_1 = arith.constant 0 : index
    %c0_2 = arith.constant 0 : index
    %1 = vector.load %arg2[%c0_1, %c0_2] : memref<16x4xf32, #tpu.memory_space<vmem>>, vector<16x4xf32>
    %cst = arith.constant dense<0.000000e+00> : vector<64x4xf32>
    %2 = tpu.matmul %0, %1, %cst {dimension_numbers = #tpu.dot_dimension_numbers<[1], [0], [0], [1], [0, 0, 1, 1], [], []>} : vector<64x16xf32>, vector<16x4xf32>, vector<64x4xf32> -> vector<64x4xf32>
    %c0_3 = arith.constant 0 : index
    %c0_4 = arith.constant 0 : index
    %3 = vector.load %arg5[%c0_3, %c0_4] : memref<64x4xf32, #tpu.memory_space<vmem>>, vector<64x4xf32>
    tpu.vector_store %arg5[%c0_3, %c0_4], %2 {strides = array<i32>} : memref<64x4xf32, #tpu.memory_space<vmem>>, vector<64x4xf32>,
    %c0_5 = arith.constant 0 : index
    %c0_6 = arith.constant 0 : index
    %4 = vector.load %arg5[%c0_5, %c0_6] : memref<64x4xf32, #tpu.memory_space<vmem>>, vector<16x4xf32>
    %c0_7 = arith.constant 0 : index
    %c0_8 = arith.constant 0 : index
    %5 = vector.load %arg6[%c0_7, %c0_8] : memref<16x16xf32, #tpu.memory_space<vmem>>, vector<16x4xf32>
    tpu.vector_store %arg6[%c0_7, %c0_8], %4 {strides = array<i32>} : memref<16x16xf32, #tpu.memory_space<vmem>>, vector<16x4xf32>,
    %c16 = arith.constant 16 : index
    %c0_9 = arith.constant 0 : index
    %6 = vector.load %arg5[%c16, %c0_9] : memref<64x4xf32, #tpu.memory_space<vmem>>, vector<16x4xf32>
    %c0_10 = arith.constant 0 : index
    %c4 = arith.constant 4 : index
    %7 = vector.load %arg6[%c0_10, %c4] : memref<16x16xf32, #tpu.memory_space<vmem>>, vector<16x4xf32>
    tpu.vector_store %arg6[%c0_10, %c4], %6 {strides = array<i32>} : memref<16x16xf32, #tpu.memory_space<vmem>>, vector<16x4xf32>,
    %c32 = arith.constant 32 : index
    %c0_11 = arith.constant 0 : index
    %8 = vector.load %arg5[%c32, %c0_11] : memref<64x4xf32, #tpu.memory_space<vmem>>, vector<16x4xf32>
    %c0_12 = arith.constant 0 : index
    %c8 = arith.constant 8 : index
    %9 = vector.load %arg6[%c0_12, %c8] : memref<16x16xf32, #tpu.memory_space<vmem>>, vector<16x4xf32>
    tpu.vector_store %arg6[%c0_12, %c8], %8 {strides = array<i32>} : memref<16x16xf32, #tpu.memory_space<vmem>>, vector<16x4xf32>,
    %c48 = arith.constant 48 : index
    %c0_13 = arith.constant 0 : index
    %10 = vector.load %arg5[%c48, %c0_13] : memref<64x4xf32, #tpu.memory_space<vmem>>, vector<16x4xf32>
    %c0_14 = arith.constant 0 : index
    %c12 = arith.constant 12 : index
    %11 = vector.load %arg6[%c0_14, %c12] : memref<16x16xf32, #tpu.memory_space<vmem>>, vector<16x4xf32>
    tpu.vector_store %arg6[%c0_14, %c12], %10 {strides = array<i32>} : memref<16x16xf32, #tpu.memory_space<vmem>>, vector<16x4xf32>,
    %c0_15 = arith.constant 0 : index
    %c0_16 = arith.constant 0 : index
    %12 = vector.load %arg3[%c0_15, %c0_16] : memref<4x16xf32, #tpu.memory_space<vmem>>, vector<4x16xf32>
    %c0_17 = arith.constant 0 : index
    %c0_18 = arith.constant 0 : index
    %13 = vector.load %arg6[%c0_17, %c0_18] : memref<16x16xf32, #tpu.memory_space<vmem>>, vector<16x16xf32>
    %cst_19 = arith.constant dense<0.000000e+00> : vector<4x16xf32>
    %14 = tpu.matmul %12, %13, %cst_19 {dimension_numbers = #tpu.dot_dimension_numbers<[1], [0], [0], [1], [0, 0, 1, 1], [], []>} : vector<4x16xf32>, vector<16x16xf32>, vector<4x16xf32> -> vector<4x16xf32>
    %c0_20 = arith.constant 0 : index
    %c0_21 = arith.constant 0 : index
    %c0_22 = arith.constant 0 : index
    %15 = vector.load %arg4[%c0_20, %c0_21, %c0_22] : memref<1x4x16xf32, #tpu.memory_space<vmem>>, vector<1x4x16xf32>
    %16 = vector.shape_cast %15 : vector<1x4x16xf32> to vector<4x16xf32>
    %17 = vector.shape_cast %14 : vector<4x16xf32> to vector<1x4x16xf32>
    tpu.vector_store %arg4[%c0_20, %c0_21, %c0_22], %17 {strides = array<i32>} : memref<1x4x16xf32, #tpu.memory_space<vmem>>, vector<1x4x16xf32>,
    return
  }
  func.func @transform_0(%arg0: i32) -> (i32, i32) {
    %c0_i32 = arith.constant 0 : i32
    %c0_i32_0 = arith.constant 0 : i32
    return %arg0, %c0_i32 : i32, i32
  }
  func.func @transform_1(%arg0: i32) -> (i32, i32) {
    %c0_i32 = arith.constant 0 : i32
    %c0_i32_0 = arith.constant 0 : i32
    %c0_i32_1 = arith.constant 0 : i32
    return %c0_i32, %c0_i32_0 : i32, i32
  }
  func.func @transform_2(%arg0: i32) -> (i32, i32) {
    %c0_i32 = arith.constant 0 : i32
    %c0_i32_0 = arith.constant 0 : i32
    %c0_i32_1 = arith.constant 0 : i32
    return %c0_i32, %c0_i32_0 : i32, i32
  }
  func.func @transform_3(%arg0: i32) -> (i32, i32, i32) {
    %c0_i32 = arith.constant 0 : i32
    %c0_i32_0 = arith.constant 0 : i32
    %c0_i32_1 = arith.constant 0 : i32
    return %arg0, %c0_i32, %c0_i32_0 : i32, i32, i32
  }
}

</mosaic_0001>

<llo_original>
// kernel: tpu_custom_call.1
$region0: #{tpu_custom_call.1}
  #allocation0 [shape = 'u32[]', space=smem, size = 0x4, offset = 0x4, fixed_abs, tag = 'smem constant byte address 0x4 - core index']
  #allocation1 [shape = 'u32[72,128]{1,0:T(1,128)}', space=vmem, size = 0x9000, scoped, tag = 'internal scratch']
  #allocation2 [shape = 'f32[64,4]{1,0:T(8,128)}', space=vmem, size = 0x8000, scoped, tag = 'scratch operand']
  #allocation3 [shape = 'f32[16,16]{1,0:T(8,128)}', space=vmem, size = 0x2000, scoped, tag = 'scratch operand']
  %s0 = inlined_call_operand.vmem [shape: f32[128,16], index: 0, kind: input, shape index: {}]
  %s1 = inlined_call_operand.vmem [shape: f32[16,4], index: 1, kind: input, shape index: {}]
  %s2 = inlined_call_operand.vmem [shape: f32[4,16], index: 2, kind: input, shape index: {}]
  %s3 = inlined_call_operand.hbm [shape: f32[2,4,16], index: 3, kind: output, shape index: {}]
  %s4 = sld [smem:[#allocation0]]
  $region45: #{tpu_custom_call.1} parent=0
    _
  %s6 = ssub.s32 1, %s4
  %s7 = scalar_select 0, %s6, %s4
  $region1: #{tpu_custom_call.1} parent=0
    #allocation4 [shape = 'u8[4096]{0}', space=vmem, size = 0x1000, scoped, tag = 'output window, operand 0']
    #allocation5 [shape = 's32[2]{0}', space=sflag, size = 0x8, scoped, tag = 'scoped memory for tpu_custom_call.1']
    %8 = vsyncpa [#allocation5], 0
    %s9 = scalar_lea.sflag [#allocation5], 1
    %10 = vsyncpa %s9, 0
    loop: start=0, step=1, limit=4
    $region2: #{tpu_custom_call.1} parent=1 // loop_pre_header
      _
    $region3: #{tpu_custom_call.1} parent=1 // loop_header
      %s12 = sphi 0, %s16
      %p13 = scmp.ge.s32.totalorder %s12, 4
      %s22 = sphi 0, %s24
      %s25 = sphi 0, %s22
      %s26 = sphi 0, %s25
      %s42 = sphi 0, %s26
      %s46 = sphi 0, %s46
      %s48 = sphi 0, %s46
      %s49 = sphi 0, %s48
      %s63 = sphi 0, %s49
      %s67 = sphi 0, %s67
      %s69 = sphi 0, %s67
      %s70 = sphi 0, %s69
      %s84 = sphi 0, %s70
      %s90 = sphi 0, %s92
      %s93 = sphi 0, %s90
      %s94 = sphi 0, %s93
      %s110 = sphi 0, %s94
    $region4: #{tpu_custom_call.1} parent=1 // loop_header_branch
      %15 = sbr.rel (%p13) target = $region8
    $region5: #{tpu_custom_call.1} parent=1 // loop_body
      %s17 = ssub.s32 %s12, 1
      %s18 = ssub.s32 %s12, 2
      %s19 = sadd.s32 %s12, 1
      %s20 = ssub.s32 %s12, %s19
      %p21 = scmp.eq.s32.totalorder %s20, 0
      %s23 = sadd.s32 %s22, 1
      %s24 = scalar_select %p21, %s22, %s23
      %p27 = pneg %p21
      %p28 = scmp.eq.s32.totalorder %s12, 1
      %p29 = por %p27, %p28
      %p30 = scmp.ne.s32.totalorder %s22, %s25
      %p31 = scmp.eq.s32.totalorder %s12, 0
      %p32 = por %p30, %p31
      %p33 = scmp.ne.s32.totalorder %s22, %s25
      %p34 = scmp.eq.s32.totalorder %s17, 1
      %p35 = por %p33, %p34
      %p36 = scmp.ne.s32.totalorder %s25, %s26
      %p37 = scmp.eq.s32.totalorder %s17, 0
      %p38 = por %p36, %p37
      %p39 = scmp.ne.s32.totalorder %s25, %s26
      %p40 = scmp.eq.s32.totalorder %s18, 1
      %p41 = por %p39, %p40
      %p43 = scmp.ne.s32.totalorder %s26, %s42
      %p44 = scmp.eq.s32.totalorder %s18, 0
      %p45 = por %p43, %p44
      %s47 = sadd.s32 %s46, 1
      %p50 = scmp.eq.s32.totalorder %s12, 1
      %p51 = scmp.ne.s32.totalorder %s46, %s48
      %p52 = scmp.eq.s32.totalorder %s12, 0
      %p53 = por %p51, %p52
      %p54 = scmp.ne.s32.totalorder %s46, %s48
      %p55 = scmp.eq.s32.totalorder %s17, 1
      %p56 = por %p54, %p55
      %p57 = scmp.ne.s32.totalorder %s48, %s49
      %p58 = scmp.eq.s32.totalorder %s17, 0
      %p59 = por %p57, %p58
      %p60 = scmp.ne.s32.totalorder %s48, %s49
      %p61 = scmp.eq.s32.totalorder %s18, 1
      %p62 = por %p60, %p61
      %p64 = scmp.ne.s32.totalorder %s49, %s63
      %p65 = scmp.eq.s32.totalorder %s18, 0
      %p66 = por %p64, %p65
      %s68 = sadd.s32 %s67, 1
      %p71 = scmp.eq.s32.totalorder %s12, 1
      %p72 = scmp.ne.s32.totalorder %s67, %s69
      %p73 = scmp.eq.s32.totalorder %s12, 0
      %p74 = por %p72, %p73
      %p75 = scmp.ne.s32.totalorder %s67, %s69
      %p76 = scmp.eq.s32.totalorder %s17, 1
      %p77 = por %p75, %p76
      %p78 = scmp.ne.s32.totalorder %s69, %s70
      %p79 = scmp.eq.s32.totalorder %s17, 0
      %p80 = por %p78, %p79
      %p81 = scmp.ne.s32.totalorder %s69, %s70
      %p82 = scmp.eq.s32.totalorder %s18, 1
      %p83 = por %p81, %p82
      %p85 = scmp.ne.s32.totalorder %s70, %s84
      %p86 = scmp.eq.s32.totalorder %s18, 0
      %p87 = por %p85, %p86
      %s88 = ssub.s32 %s12, %s19
      %p89 = scmp.eq.s32.totalorder %s88, 0
      %s91 = sadd.s32 %s90, 1
      %s92 = scalar_select %p89, %s90, %s91
      %p95 = pneg %p89
      %p96 = scmp.eq.s32.totalorder %s12, 1
      %p97 = por %p95, %p96
      %p98 = scmp.ne.s32.totalorder %s90, %s93
      %p99 = scmp.eq.s32.totalorder %s12, 0
      %p100 = por %p98, %p99
      %p101 = scmp.ne.s32.totalorder %s90, %s93
      %p102 = scmp.eq.s32.totalorder %s17, 1
      %p103 = por %p101, %p102
      %p104 = scmp.ne.s32.totalorder %s93, %s94
      %p105 = scmp.eq.s32.totalorder %s17, 0
      %p106 = por %p104, %p105
      %p107 = scmp.ne.s32.totalorder %s93, %s94
      %p108 = scmp.eq.s32.totalorder %s18, 1
      %p109 = por %p107, %p108
      %p111 = scmp.ne.s32.totalorder %s94, %s110
      %p112 = scmp.eq.s32.totalorder %s18, 0
      %p113 = por %p111, %p112
      %p114 = scmp.le.s32.totalorder 1, %s12
      %p115 = scmp.lt.s32.totalorder %s12, 3
      %p116 = pnand %p114, %p115
      %p117 = pneg %p116
      // Predicated region
      $region9: #{tpu_custom_call.1} parent=5 // pred_check
        _
      $region10: #{tpu_custom_call.1} parent=5 // pred_check_branch
        %119 = sbr.rel (%p116) target = $region12
      $region11: #{tpu_custom_call.1} parent=5 // pred_region
        %s120 = ssub.s32 %s12, 1
        // Predicated region
        $region13: #{tpu_custom_call.1} parent=11 // pred_check
          %p121 = pneg %p59
        $region14: #{tpu_custom_call.1} parent=11 // pred_check_branch
          %123 = sbr.rel (%p121) target = $region16
        $region15: #{tpu_custom_call.1} parent=11 // pred_region
          _
        $region16: #{tpu_custom_call.1} parent=11 // pred_fallthru
          _
        // Predicated region
        $region17: #{tpu_custom_call.1} parent=11 // pred_check
          %p124 = pneg %p80
        $region18: #{tpu_custom_call.1} parent=11 // pred_check_branch
          %126 = sbr.rel (%p124) target = $region20
        $region19: #{tpu_custom_call.1} parent=11 // pred_region
          _
        $region20: #{tpu_custom_call.1} parent=11 // pred_fallthru
          _
      $region12: #{tpu_custom_call.1} parent=5 // pred_fallthru
        _
      %p127 = scmp.lt.s32.totalorder %s12, 2
      // Predicated region
      $region21: #{tpu_custom_call.1} parent=5 // pred_check
        %p128 = pneg %p127
      $region22: #{tpu_custom_call.1} parent=5 // pred_check_branch
        %130 = sbr.rel (%p128) target = $region24
      $region23: #{tpu_custom_call.1} parent=5 // pred_region
        // Predicated region
        $region25: #{tpu_custom_call.1} parent=23 // pred_check
          %p131 = pneg %p32
        $region26: #{tpu_custom_call.1} parent=23 // pred_check_branch
          %133 = sbr.rel (%p131) target = $region28
        $region27: #{tpu_custom_call.1} parent=23 // pred_region
          %s134 = smul.u32 8, %s12
          %p135 = scmp.lt.s32.totalorder %s134, 15
          %s136 = scalar_select %p135, %s134, 15
          %s137 = smul.addr %s136, 8
          %s138 = scalar_lea.vmem %s0, %s137
          %s139 = smul.u32 8, %s12
        $region28: #{tpu_custom_call.1} parent=23 // pred_fallthru
          _
      $region24: #{tpu_custom_call.1} parent=5 // pred_fallthru
        _
      %p140 = scmp.le.s32.totalorder 1, %s12
      %p141 = scmp.lt.s32.totalorder %s12, 3
      %p142 = pnand %p140, %p141
      %p143 = pneg %p142
      // Predicated region
      $region29: #{tpu_custom_call.1} parent=5 // pred_check
        _
      $region30: #{tpu_custom_call.1} parent=5 // pred_check_branch
        %145 = sbr.rel (%p142) target = $region32
      $region31: #{tpu_custom_call.1} parent=5 // pred_region
        %s146 = ssub.s32 %s12, 1
        %s147 = smul.u32 8, %s17
        %p148 = scmp.lt.s32.totalorder %s147, 15
        %s149 = scalar_select %p148, %s147, 15
        %s150 = smul.addr %s149, 8
        %s151 = scalar_lea.vmem %s0, %s150
        %p152 = pneg %p38
        %p153 = pneg %p35
        %p154 = pneg %p59
        %p155 = pneg %p56
        %p156 = pneg %p80
        %p157 = pneg %p77
        %p158 = pneg %p106
        %p159 = pneg %p103
        %s160 = sand.u32 %s93, 1
        %s161 = scalar_lea.sflag [#allocation5], %s160
        %s162 = sand.u32 %s93, 1
        %s163 = smul.addr %s162, 4
        %s164 = scalar_lea.vmem [#allocation4], %s163
        %s165 = smul.u32 8, %s17
        %p166 = scmp.lt.s32.totalorder %s165, 15
        %s167 = scalar_select %p166, %s165, 15
        %s168 = smul.addr %s167, 8
        %s169 = scalar_lea.vmem %s0, %s168
        %s170 = smul.u32 8, %s17
        %v171 = vld [vmem:[%s169] sm:$0xff]
        %v172 = vld [vmem:[%s169 + $0x8] sm:$0xff]
        %v173 = vld [vmem:[%s169 + $0x10] sm:$0xff]
        %v174 = vld [vmem:[%s169 + $0x18] sm:$0xff]
        %v175 = vld [vmem:[%s169 + $0x20] sm:$0xff]
        %v176 = vld [vmem:[%s169 + $0x28] sm:$0xff]
        %v177 = vld [vmem:[%s169 + $0x30] sm:$0xff]
        %v178 = vld [vmem:[%s169 + $0x38] sm:$0xff]
        %v179 = vld [vmem:[%s1] sm:$0xff]
        %v180 = vld [vmem:[%s1 + $0x8] sm:$0xff]
        %vm181 = vcmask 130048
        %v183 = vsel %vm181, %v171, 0
        %v186 = vsel %vm181, %v172, 0
        %v189 = vsel %vm181, %v173, 0
        %v192 = vsel %vm181, %v174, 0
        %v195 = vsel %vm181, %v175, 0
        %v198 = vsel %vm181, %v176, 0
        %v201 = vsel %vm181, %v177, 0
        %v204 = vsel %vm181, %v178, 0
        %206 = vmatpush.msra.mxu0 0.0
        %207 = vmatpush.msra.mxu0 0.0
        %208 = vmatpush.msra.mxu0 0.0
        %209 = vmatpush.msra.mxu0 0.0
        %210 = vmatpush.msra.mxu0 0.0
        %211 = vmatpush.msra.mxu0 0.0
        %212 = vmatpush.msra.mxu0 0.0
        %213 = vmatpush.msra.mxu0 0.0
        %214 = vmatpush.msra.mxu0 0.0
        %215 = vmatpush.msra.mxu0 0.0
        %216 = vmatpush.msra.mxu0 0.0
        %217 = vmatpush.msra.mxu0 0.0
        %218 = vmatpush.msra.mxu0 0.0
        %219 = vmatpush.msra.mxu0 0.0
        %220 = vmatpush.msra.mxu0 %v180
        %221 = vmatpush.msra.mxu0 %v179
        %222 = vmatmul.f32.gmra.mxu0 %v183
        %v223 = vpop.f32.mrf.mxu0
        %v224 = vadd.f32 0.0, %v223
        %225 = vmatmul.f32.gmra.mxu0 %v186
        %v226 = vpop.f32.mrf.mxu0
        %v227 = vadd.f32 0.0, %v226
        %228 = vmatmul.f32.gmra.mxu0 %v189
        %v229 = vpop.f32.mrf.mxu0
        %v230 = vadd.f32 0.0, %v229
        %231 = vmatmul.f32.gmra.mxu0 %v192
        %v232 = vpop.f32.mrf.mxu0
        %v233 = vadd.f32 0.0, %v232
        %234 = vmatmul.f32.gmra.mxu0 %v195
        %v235 = vpop.f32.mrf.mxu0
        %v236 = vadd.f32 0.0, %v235
        %237 = vmatmul.f32.gmra.mxu0 %v198
        %v238 = vpop.f32.mrf.mxu0
        %v239 = vadd.f32 0.0, %v238
        %240 = vmatmul.f32.gmra.mxu0 %v201
        %v241 = vpop.f32.mrf.mxu0
        %v242 = vadd.f32 0.0, %v241
        %243 = vmatmul.f32.gmra.mxu0 %v204
        %v244 = vpop.f32.mrf.mxu0
        %v245 = vadd.f32 0.0, %v244
        %246 = vdwg.mxu0
        %vm247 = vcmask 31744
        %248 = vst.msk [vmem:[#allocation2] sm:$0xff] %vm247, %v224
        %249 = vst.msk [vmem:[#allocation2 + $0x8] sm:$0xff] %vm247, %v227
        %250 = vst.msk [vmem:[#allocation2 + $0x10] sm:$0xff] %vm247, %v230
        %251 = vst.msk [vmem:[#allocation2 + $0x18] sm:$0xff] %vm247, %v233
        %252 = vst.msk [vmem:[#allocation2 + $0x20] sm:$0xff] %vm247, %v236
        %253 = vst.msk [vmem:[#allocation2 + $0x28] sm:$0xff] %vm247, %v239
        %254 = vst.msk [vmem:[#allocation2 + $0x30] sm:$0xff] %vm247, %v242
        %255 = vst.msk [vmem:[#allocation2 + $0x38] sm:$0xff] %vm247, %v245
        %v256 = vld [vmem:[#allocation2] sm:$0xff]
        %v257 = vld [vmem:[#allocation2 + $0x8] sm:$0xff]
        %258 = vst.msk [vmem:[#allocation3] sm:$0xff] %vm247, %v256
        %259 = vst.msk [vmem:[#allocation3 + $0x8] sm:$0xff] %vm247, %v257
        %v260 = vld [vmem:[#allocation2 + $0x10] sm:$0xff]
        %v261 = vld [vmem:[#allocation2 + $0x18] sm:$0xff]
        %264 = vrot.lane.b32.xlu0 %v260, 4
        %v265 = vpop.permute.xlu0 %264
        %266 = vrot.lane.b32.xlu0 %v261, 4
        %v267 = vpop.permute.xlu0 %266
        %vm270 = vcmask 64544
        %271 = vst.msk [vmem:[#allocation3] sm:$0xff] %vm270, %v265
        %272 = vst.msk [vmem:[#allocation3 + $0x8] sm:$0xff] %vm270, %v267
        %v273 = vld [vmem:[#allocation2 + $0x20] sm:$0xff]
        %v274 = vld [vmem:[#allocation2 + $0x28] sm:$0xff]
        %277 = vrot.lane.b32.xlu0 %v273, 8
        %v278 = vpop.permute.xlu0 %277
        %279 = vrot.lane.b32.xlu0 %v274, 8
        %v280 = vpop.permute.xlu0 %279
        %vm283 = vcmask 97344
        %284 = vst.msk [vmem:[#allocation3] sm:$0xff] %vm283, %v278
        %285 = vst.msk [vmem:[#allocation3 + $0x8] sm:$0xff] %vm283, %v280
        %v286 = vld [vmem:[#allocation2 + $0x30] sm:$0xff]
        %v287 = vld [vmem:[#allocation2 + $0x38] sm:$0xff]
        %290 = vrot.lane.b32.xlu0 %v286, 12
        %v291 = vpop.permute.xlu0 %290
        %292 = vrot.lane.b32.xlu0 %v287, 12
        %v293 = vpop.permute.xlu0 %292
        %vm296 = vcmask 130144
        %297 = vst.msk [vmem:[#allocation3] sm:$0xff] %vm296, %v291
        %298 = vst.msk [vmem:[#allocation3 + $0x8] sm:$0xff] %vm296, %v293
        %v299 = vld [vmem:[%s2] sm:$0xf]
        %v300 = vld [vmem:[#allocation3] sm:$0xff]
        %v301 = vld [vmem:[#allocation3 + $0x8] sm:$0xff]
        %v303 = vsel %vm181, %v299, 0
        %305 = vmatpush.msra.mxu0 0.0
        %306 = vmatpush.msra.mxu0 0.0
        %307 = vmatpush.msra.mxu0 0.0
        %308 = vmatpush.msra.mxu0 0.0
        %309 = vmatpush.msra.mxu0 0.0
        %310 = vmatpush.msra.mxu0 0.0
        %311 = vmatpush.msra.mxu0 0.0
        %312 = vmatpush.msra.mxu0 0.0
        %313 = vmatpush.msra.mxu0 0.0
        %314 = vmatpush.msra.mxu0 0.0
        %315 = vmatpush.msra.mxu0 0.0
        %316 = vmatpush.msra.mxu0 0.0
        %317 = vmatpush.msra.mxu0 0.0
        %318 = vmatpush.msra.mxu0 0.0
        %319 = vmatpush.msra.mxu0 %v301
        %320 = vmatpush.msra.mxu0 %v300
        %321 = vmatmul.f32.gmra.mxu0 %v303
        %v322 = vpop.f32.mrf.mxu0
        %v323 = vadd.f32 0.0, %v322
        %324 = vdwg.mxu0
        %vm325 = vcmask 125952
        %326 = vst.msk [vmem:[%s164] sm:$0xf] %vm325, %v323
        %s327 = sand.u32 %s93, 1
        %s328 = scalar_lea.sflag [#allocation5], %s327
        %s329 = sand.u32 %s93, 1
        %s330 = smul.addr %s329, 4
        %s331 = scalar_lea.vmem [#allocation4], %s330
        // Predicated region
        $region33: #{tpu_custom_call.1} parent=31 // pred_check
          %p332 = pneg %p103
        $region34: #{tpu_custom_call.1} parent=31 // pred_check_branch
          %334 = sbr.rel (%p332) target = $region36
        $region35: #{tpu_custom_call.1} parent=31 // pred_region
          %336 = vsyncadd %s328, 0
          %s337 = smul.addr %s17, 4
          %s338 = scalar_lea.hbm %s3, %s337
          %s340 = sshll.u32 %s331, 4
          %s341 = int_to_ptr.vmem [resolvable:$true] %s340
          %s342 = sshll.u32 %s338, 4
          %s343 = int_to_ptr.hbm [resolvable:$true] %s342
          %345 = dma.vmem_to_hbm [thread:$0]  %s341, 64, %s343, %s328
        $region36: #{tpu_custom_call.1} parent=31 // pred_fallthru
          _
      $region32: #{tpu_custom_call.1} parent=5 // pred_fallthru
        _
      %p346 = scmp.le.s32.totalorder 2, %s12
      // Predicated region
      $region37: #{tpu_custom_call.1} parent=5 // pred_check
        %p347 = pneg %p346
      $region38: #{tpu_custom_call.1} parent=5 // pred_check_branch
        %349 = sbr.rel (%p347) target = $region40
      $region39: #{tpu_custom_call.1} parent=5 // pred_region
        %s350 = ssub.s32 %s12, 2
        // Predicated region
        $region41: #{tpu_custom_call.1} parent=39 // pred_check
          %p351 = pneg %p109
        $region42: #{tpu_custom_call.1} parent=39 // pred_check_branch
          %353 = sbr.rel (%p351) target = $region44
        $region43: #{tpu_custom_call.1} parent=39 // pred_region
          %s354 = sand.u32 %s94, 1
          %s355 = scalar_lea.sflag [#allocation5], %s354
          %s356 = sand.u32 %s94, 1
          %s357 = smul.addr %s356, 4
          %s358 = scalar_lea.vmem [#allocation4], %s357
          %360 = dma.done %s355, 64
        $region44: #{tpu_custom_call.1} parent=39 // pred_fallthru
          _
      $region40: #{tpu_custom_call.1} parent=5 // pred_fallthru
        _
    $region6: #{tpu_custom_call.1} parent=1 // loop_footer
      %s16 = sadd.s32 1, %s12
    $region7: #{tpu_custom_call.1} parent=1 // loop_footer_branch
      %11 = sbr.rel target = $region3
    $region8: #{tpu_custom_call.1} parent=1 // loop_exit
      _
    %361 = vsyncpa [#allocation5], 1
    %s362 = scalar_lea.sflag [#allocation5], 1
    %363 = vsyncpa %s362, 1

</llo_original>
